<compile_context>
chip_gen: v5e
topology: v5e:2x2
jax: 0.10.0
libtpu: 0.0.40
codegen_flags: <defaults>
</compile_context>

<pallas_src>
import jax
import jax.numpy as jnp
from jax import lax
from jax.experimental import pallas as pl
from jax.experimental.pallas import tpu as pltpu

BN_EPS = 1e-5
LANE = 128           # final layer padded to this many output lanes
MAX_BATCH = 4096     # whole-batch-in-VMEM design limit (see note above)


def dqn_kernel(x_ref,
               w1_ref, b1_ref, g1_ref, be1_ref,
               w2_ref, b2_ref, g2_ref, be2_ref,
               w3_ref, b3_ref, g3_ref, be3_ref,
               w4_ref, b4_ref,
               w5_ref, b5_ref,
               out_ref):
    """Whole DQN MLP forward in one kernel (everything resident in VMEM)."""

    def linear(h, w_ref, b_ref):
        # bf16 x bf16 on the MXU, f32 accumulation; bias (1, out) broadcasts.
        return jnp.dot(h.astype(jnp.bfloat16), w_ref[...],
                       preferred_element_type=jnp.float32) + b_ref[...]

    def batchnorm(h, g_ref, be_ref):
        # Training-mode BatchNorm1d: biased batch statistics over the batch
        # axis, folded into a single per-feature scale/offset.
        mean = jnp.mean(h, axis=0, keepdims=True)
        var = jnp.mean((h - mean) ** 2, axis=0, keepdims=True)
        scale = g_ref[...] * lax.rsqrt(var + BN_EPS)   # (1, 256), rsqrt on EUP
        offset = be_ref[...] - mean * scale
        return h * scale + offset

    x = x_ref[...].astype(jnp.float32)
    h = jnp.maximum(batchnorm(linear(x, w1_ref, b1_ref), g1_ref, be1_ref), 0.0)
    h = jnp.maximum(batchnorm(linear(h, w2_ref, b2_ref), g2_ref, be2_ref), 0.0)
    h = jnp.maximum(batchnorm(linear(h, w3_ref, b3_ref), g3_ref, be3_ref), 0.0)
    h = jnp.maximum(linear(h, w4_ref, b4_ref), 0.0)
    # Final layer is padded to LANE output columns -> lane-dense store.
    out_ref[...] = linear(h, w5_ref, b5_ref).astype(out_ref.dtype)


def dqn_forward(x, params, out_dim):
    """x: (batch, input_dim) f32.  params: output of prepare_params()."""
    batch, in_dim = x.shape
    assert 0 < batch <= MAX_BATCH, "single-shot kernel; see two-pass-BN TODO"

    args = (
        x,
        params["w1"], params["b1"], params["g1"], params["be1"],
        params["w2"], params["b2"], params["g2"], params["be2"],
        params["w3"], params["b3"], params["g3"], params["be3"],
        params["w4"], params["b4"],
        params["w5"], params["b5"],
    )
    vmem_spec = pl.BlockSpec(memory_space=pltpu.MemorySpace.VMEM)

    input_bytes = sum(int(a.size) * a.dtype.itemsize for a in args)
    out_bytes = batch * LANE * 4
    # ~8 KiB of live f32/bf16 activation temporaries per batch row, + margin.
    vmem_limit = int(min(max(input_bytes + out_bytes + batch * 8 * 1024 + (4 << 20),
                             16 << 20),
                         48 << 20))
    flops = 2 * batch * (in_dim * 256 + 256 * 256 + 256 * 256 + 256 * 128
                         + 128 * LANE)
    cost = pl.CostEstimate(flops=flops, transcendentals=3 * 256,
                           bytes_accessed=input_bytes + out_bytes)

    out_padded = pl.pallas_call(
        dqn_kernel,
        out_shape=jax.ShapeDtypeStruct((batch, LANE), jnp.float32),
        in_specs=[vmem_spec] * len(args),
        out_specs=vmem_spec,
        compiler_params=pltpu.CompilerParams(vmem_limit_bytes=vmem_limit),
        cost_estimate=cost,
    )(*args)
    return out_padded[:, :out_dim]


def init_params(key, input_dim, output_dim):
    """f32 params matching PyTorch nn.Linear init; W stored as [in, out]."""
    dims = [(input_dim, 256), (256, 256), (256, 256), (256, 128), (128, output_dim)]
    params = {}
    keys = jax.random.split(key, 2 * len(dims))
    for i, (din, dout) in enumerate(dims):
        kw, kb = keys[2 * i], keys[2 * i + 1]
        bound = 1.0 / jnp.sqrt(float(din))
        params[f"w{i+1}"] = jax.random.uniform(kw, (din, dout), jnp.float32, -bound, bound)
        params[f"b{i+1}"] = jax.random.uniform(kb, (1, dout), jnp.float32, -bound, bound)
    # BatchNorm affine params (PyTorch init: gamma=1, beta=0)
    for i in (1, 2, 3):
        params[f"g{i}"] = jnp.ones((1, 256), jnp.float32)
        params[f"be{i}"] = jnp.zeros((1, 256), jnp.float32)
    return params


def prepare_params(params, output_dim):
    """One-time prep (do NOT redo per call): cast weights to bf16 (halves
    weight HBM traffic; MXU takes bf16 natively, accumulation stays f32) and
    zero-pad the final layer to LANE output columns for lane-dense stores."""
    p = dict(params)
    for i in range(1, 6):
        p[f"w{i}"] = params[f"w{i}"].astype(jnp.bfloat16)
    pad = LANE - output_dim
    p["w5"] = jnp.pad(p["w5"], ((0, 0), (0, pad)))
    p["b5"] = jnp.pad(params["b5"], ((0, 0), (0, pad)))
    return p


if __name__ == "__main__":
    input_dim, output_dim, batch = 32, 4, 8
    key = jax.random.PRNGKey(0)
    pkey, xkey = jax.random.split(key)
    params = prepare_params(init_params(pkey, input_dim, output_dim), output_dim)
    x = jax.random.normal(xkey, (batch, input_dim), jnp.float32)

    out = dqn_forward(x, params, output_dim)
    jax.block_until_ready(out)
    assert out.shape == (batch, output_dim)
    print("KERNEL_OK")
</pallas_src>

<mosaic_0001>
module attributes {stable_mosaic.version = 11 : i64} {
  func.func @dqn_kernel(%arg0: memref<8x32xf32, #tpu.memory_space<vmem>>, %arg1: memref<32x256xbf16, #tpu.memory_space<vmem>>, %arg2: memref<1x256xf32, #tpu.memory_space<vmem>>, %arg3: memref<1x256xf32, #tpu.memory_space<vmem>>, %arg4: memref<1x256xf32, #tpu.memory_space<vmem>>, %arg5: memref<256x256xbf16, #tpu.memory_space<vmem>>, %arg6: memref<1x256xf32, #tpu.memory_space<vmem>>, %arg7: memref<1x256xf32, #tpu.memory_space<vmem>>, %arg8: memref<1x256xf32, #tpu.memory_space<vmem>>, %arg9: memref<256x256xbf16, #tpu.memory_space<vmem>>, %arg10: memref<1x256xf32, #tpu.memory_space<vmem>>, %arg11: memref<1x256xf32, #tpu.memory_space<vmem>>, %arg12: memref<1x256xf32, #tpu.memory_space<vmem>>, %arg13: memref<256x128xbf16, #tpu.memory_space<vmem>>, %arg14: memref<1x128xf32, #tpu.memory_space<vmem>>, %arg15: memref<128x128xbf16, #tpu.memory_space<vmem>>, %arg16: memref<1x128xf32, #tpu.memory_space<vmem>>, %arg17: memref<8x128xf32, #tpu.memory_space<vmem>>) attributes {dimension_semantics = [], scalar_prefetch = 0 : i64, scratch_operands = 0 : i64, tpu.core_type = #tpu.core_type<tc>} {
    %c0 = arith.constant 0 : index
    %c0_0 = arith.constant 0 : index
    %0 = vector.load %arg0[%c0, %c0_0] : memref<8x32xf32, #tpu.memory_space<vmem>>, vector<8x32xf32>
    %1 = arith.truncf %0 : vector<8x32xf32> to vector<8x32xbf16>
    %c0_1 = arith.constant 0 : index
    %c0_2 = arith.constant 0 : index
    %2 = vector.load %arg1[%c0_1, %c0_2] : memref<32x256xbf16, #tpu.memory_space<vmem>>, vector<32x256xbf16>
    %cst = arith.constant dense<0.000000e+00> : vector<8x256xf32>
    %3 = tpu.matmul %1, %2, %cst {dimension_numbers = #tpu.dot_dimension_numbers<[1], [0], [0], [1], [0, 0, 1, 1], [], []>} : vector<8x32xbf16>, vector<32x256xbf16>, vector<8x256xf32> -> vector<8x256xf32>
    %c0_3 = arith.constant 0 : index
    %c0_4 = arith.constant 0 : index
    %4 = vector.load %arg2[%c0_3, %c0_4] : memref<1x256xf32, #tpu.memory_space<vmem>>, vector<1x256xf32>
    %5 = vector.broadcast %4 : vector<1x256xf32> to vector<8x256xf32>
    %6 = arith.addf %3, %5 : vector<8x256xf32>
    %cst_5 = arith.constant dense<0.000000e+00> : vector<256xf32>
    %7 = vector.multi_reduction <add>, %6, %cst_5 [0] : vector<8x256xf32> to vector<256xf32>
    %8 = vector.shape_cast %7 : vector<256xf32> to vector<1x256xf32>
    %cst_6 = arith.constant 8.000000e+00 : f32
    %9 = vector.broadcast %cst_6 : f32 to vector<1x256xf32>
    %10 = arith.divf %8, %9 : vector<1x256xf32>
    %11 = vector.broadcast %10 : vector<1x256xf32> to vector<8x256xf32>
    %12 = arith.subf %6, %11 : vector<8x256xf32>
    %13 = arith.mulf %12, %12 : vector<8x256xf32>
    %cst_7 = arith.constant dense<0.000000e+00> : vector<256xf32>
    %14 = vector.multi_reduction <add>, %13, %cst_7 [0] : vector<8x256xf32> to vector<256xf32>
    %15 = vector.shape_cast %14 : vector<256xf32> to vector<1x256xf32>
    %cst_8 = arith.constant 8.000000e+00 : f32
    %16 = vector.broadcast %cst_8 : f32 to vector<1x256xf32>
    %17 = arith.divf %15, %16 : vector<1x256xf32>
    %c0_9 = arith.constant 0 : index
    %c0_10 = arith.constant 0 : index
    %18 = vector.load %arg3[%c0_9, %c0_10] : memref<1x256xf32, #tpu.memory_space<vmem>>, vector<1x256xf32>
    %cst_11 = arith.constant 9.99999974E-6 : f32
    %19 = vector.broadcast %cst_11 : f32 to vector<1x256xf32>
    %20 = arith.addf %17, %19 : vector<1x256xf32>
    %21 = math.rsqrt %20 : vector<1x256xf32>
    %22 = arith.mulf %18, %21 : vector<1x256xf32>
    %c0_12 = arith.constant 0 : index
    %c0_13 = arith.constant 0 : index
    %23 = vector.load %arg4[%c0_12, %c0_13] : memref<1x256xf32, #tpu.memory_space<vmem>>, vector<1x256xf32>
    %24 = arith.mulf %10, %22 : vector<1x256xf32>
    %25 = arith.subf %23, %24 : vector<1x256xf32>
    %26 = vector.broadcast %22 : vector<1x256xf32> to vector<8x256xf32>
    %27 = arith.mulf %6, %26 : vector<8x256xf32>
    %28 = vector.broadcast %25 : vector<1x256xf32> to vector<8x256xf32>
    %29 = arith.addf %27, %28 : vector<8x256xf32>
    %cst_14 = arith.constant 0.000000e+00 : f32
    %30 = vector.broadcast %cst_14 : f32 to vector<8x256xf32>
    %31 = arith.maximumf %29, %30 : vector<8x256xf32>
    %32 = arith.truncf %31 : vector<8x256xf32> to vector<8x256xbf16>
    %c0_15 = arith.constant 0 : index
    %c0_16 = arith.constant 0 : index
    %33 = vector.load %arg5[%c0_15, %c0_16] : memref<256x256xbf16, #tpu.memory_space<vmem>>, vector<256x256xbf16>
    %cst_17 = arith.constant dense<0.000000e+00> : vector<8x256xf32>
    %34 = tpu.matmul %32, %33, %cst_17 {dimension_numbers = #tpu.dot_dimension_numbers<[1], [0], [0], [1], [0, 0, 1, 1], [], []>} : vector<8x256xbf16>, vector<256x256xbf16>, vector<8x256xf32> -> vector<8x256xf32>
    %c0_18 = arith.constant 0 : index
    %c0_19 = arith.constant 0 : index
    %35 = vector.load %arg6[%c0_18, %c0_19] : memref<1x256xf32, #tpu.memory_space<vmem>>, vector<1x256xf32>
    %36 = vector.broadcast %35 : vector<1x256xf32> to vector<8x256xf32>
    %37 = arith.addf %34, %36 : vector<8x256xf32>
    %cst_20 = arith.constant dense<0.000000e+00> : vector<256xf32>
    %38 = vector.multi_reduction <add>, %37, %cst_20 [0] : vector<8x256xf32> to vector<256xf32>
    %39 = vector.shape_cast %38 : vector<256xf32> to vector<1x256xf32>
    %cst_21 = arith.constant 8.000000e+00 : f32
    %40 = vector.broadcast %cst_21 : f32 to vector<1x256xf32>
    %41 = arith.divf %39, %40 : vector<1x256xf32>
    %42 = vector.broadcast %41 : vector<1x256xf32> to vector<8x256xf32>
    %43 = arith.subf %37, %42 : vector<8x256xf32>
    %44 = arith.mulf %43, %43 : vector<8x256xf32>
    %cst_22 = arith.constant dense<0.000000e+00> : vector<256xf32>
    %45 = vector.multi_reduction <add>, %44, %cst_22 [0] : vector<8x256xf32> to vector<256xf32>
    %46 = vector.shape_cast %45 : vector<256xf32> to vector<1x256xf32>
    %cst_23 = arith.constant 8.000000e+00 : f32
    %47 = vector.broadcast %cst_23 : f32 to vector<1x256xf32>
    %48 = arith.divf %46, %47 : vector<1x256xf32>
    %c0_24 = arith.constant 0 : index
    %c0_25 = arith.constant 0 : index
    %49 = vector.load %arg7[%c0_24, %c0_25] : memref<1x256xf32, #tpu.memory_space<vmem>>, vector<1x256xf32>
    %cst_26 = arith.constant 9.99999974E-6 : f32
    %50 = vector.broadcast %cst_26 : f32 to vector<1x256xf32>
    %51 = arith.addf %48, %50 : vector<1x256xf32>
    %52 = math.rsqrt %51 : vector<1x256xf32>
    %53 = arith.mulf %49, %52 : vector<1x256xf32>
    %c0_27 = arith.constant 0 : index
    %c0_28 = arith.constant 0 : index
    %54 = vector.load %arg8[%c0_27, %c0_28] : memref<1x256xf32, #tpu.memory_space<vmem>>, vector<1x256xf32>
    %55 = arith.mulf %41, %53 : vector<1x256xf32>
    %56 = arith.subf %54, %55 : vector<1x256xf32>
    %57 = vector.broadcast %53 : vector<1x256xf32> to vector<8x256xf32>
    %58 = arith.mulf %37, %57 : vector<8x256xf32>
    %59 = vector.broadcast %56 : vector<1x256xf32> to vector<8x256xf32>
    %60 = arith.addf %58, %59 : vector<8x256xf32>
    %cst_29 = arith.constant 0.000000e+00 : f32
    %61 = vector.broadcast %cst_29 : f32 to vector<8x256xf32>
    %62 = arith.maximumf %60, %61 : vector<8x256xf32>
    %63 = arith.truncf %62 : vector<8x256xf32> to vector<8x256xbf16>
    %c0_30 = arith.constant 0 : index
    %c0_31 = arith.constant 0 : index
    %64 = vector.load %arg9[%c0_30, %c0_31] : memref<256x256xbf16, #tpu.memory_space<vmem>>, vector<256x256xbf16>
    %cst_32 = arith.constant dense<0.000000e+00> : vector<8x256xf32>
    %65 = tpu.matmul %63, %64, %cst_32 {dimension_numbers = #tpu.dot_dimension_numbers<[1], [0], [0], [1], [0, 0, 1, 1], [], []>} : vector<8x256xbf16>, vector<256x256xbf16>, vector<8x256xf32> -> vector<8x256xf32>
    %c0_33 = arith.constant 0 : index
    %c0_34 = arith.constant 0 : index
    %66 = vector.load %arg10[%c0_33, %c0_34] : memref<1x256xf32, #tpu.memory_space<vmem>>, vector<1x256xf32>
    %67 = vector.broadcast %66 : vector<1x256xf32> to vector<8x256xf32>
    %68 = arith.addf %65, %67 : vector<8x256xf32>
    %cst_35 = arith.constant dense<0.000000e+00> : vector<256xf32>
    %69 = vector.multi_reduction <add>, %68, %cst_35 [0] : vector<8x256xf32> to vector<256xf32>
    %70 = vector.shape_cast %69 : vector<256xf32> to vector<1x256xf32>
    %cst_36 = arith.constant 8.000000e+00 : f32
    %71 = vector.broadcast %cst_36 : f32 to vector<1x256xf32>
    %72 = arith.divf %70, %71 : vector<1x256xf32>
    %73 = vector.broadcast %72 : vector<1x256xf32> to vector<8x256xf32>
    %74 = arith.subf %68, %73 : vector<8x256xf32>
    %75 = arith.mulf %74, %74 : vector<8x256xf32>
    %cst_37 = arith.constant dense<0.000000e+00> : vector<256xf32>
    %76 = vector.multi_reduction <add>, %75, %cst_37 [0] : vector<8x256xf32> to vector<256xf32>
    %77 = vector.shape_cast %76 : vector<256xf32> to vector<1x256xf32>
    %cst_38 = arith.constant 8.000000e+00 : f32
    %78 = vector.broadcast %cst_38 : f32 to vector<1x256xf32>
    %79 = arith.divf %77, %78 : vector<1x256xf32>
    %c0_39 = arith.constant 0 : index
    %c0_40 = arith.constant 0 : index
    %80 = vector.load %arg11[%c0_39, %c0_40] : memref<1x256xf32, #tpu.memory_space<vmem>>, vector<1x256xf32>
    %cst_41 = arith.constant 9.99999974E-6 : f32
    %81 = vector.broadcast %cst_41 : f32 to vector<1x256xf32>
    %82 = arith.addf %79, %81 : vector<1x256xf32>
    %83 = math.rsqrt %82 : vector<1x256xf32>
    %84 = arith.mulf %80, %83 : vector<1x256xf32>
    %c0_42 = arith.constant 0 : index
    %c0_43 = arith.constant 0 : index
    %85 = vector.load %arg12[%c0_42, %c0_43] : memref<1x256xf32, #tpu.memory_space<vmem>>, vector<1x256xf32>
    %86 = arith.mulf %72, %84 : vector<1x256xf32>
    %87 = arith.subf %85, %86 : vector<1x256xf32>
    %88 = vector.broadcast %84 : vector<1x256xf32> to vector<8x256xf32>
    %89 = arith.mulf %68, %88 : vector<8x256xf32>
    %90 = vector.broadcast %87 : vector<1x256xf32> to vector<8x256xf32>
    %91 = arith.addf %89, %90 : vector<8x256xf32>
    %cst_44 = arith.constant 0.000000e+00 : f32
    %92 = vector.broadcast %cst_44 : f32 to vector<8x256xf32>
    %93 = arith.maximumf %91, %92 : vector<8x256xf32>
    %94 = arith.truncf %93 : vector<8x256xf32> to vector<8x256xbf16>
    %c0_45 = arith.constant 0 : index
    %c0_46 = arith.constant 0 : index
    %95 = vector.load %arg13[%c0_45, %c0_46] : memref<256x128xbf16, #tpu.memory_space<vmem>>, vector<256x128xbf16>
    %cst_47 = arith.constant dense<0.000000e+00> : vector<8x128xf32>
    %96 = tpu.matmul %94, %95, %cst_47 {dimension_numbers = #tpu.dot_dimension_numbers<[1], [0], [0], [1], [0, 0, 1, 1], [], []>} : vector<8x256xbf16>, vector<256x128xbf16>, vector<8x128xf32> -> vector<8x128xf32>
    %c0_48 = arith.constant 0 : index
    %c0_49 = arith.constant 0 : index
    %97 = vector.load %arg14[%c0_48, %c0_49] : memref<1x128xf32, #tpu.memory_space<vmem>>, vector<1x128xf32>
    %98 = vector.broadcast %97 : vector<1x128xf32> to vector<8x128xf32>
    %99 = arith.addf %96, %98 : vector<8x128xf32>
    %cst_50 = arith.constant 0.000000e+00 : f32
    %100 = vector.broadcast %cst_50 : f32 to vector<8x128xf32>
    %101 = arith.maximumf %99, %100 : vector<8x128xf32>
    %102 = arith.truncf %101 : vector<8x128xf32> to vector<8x128xbf16>
    %c0_51 = arith.constant 0 : index
    %c0_52 = arith.constant 0 : index
    %103 = vector.load %arg15[%c0_51, %c0_52] : memref<128x128xbf16, #tpu.memory_space<vmem>>, vector<128x128xbf16>
    %cst_53 = arith.constant dense<0.000000e+00> : vector<8x128xf32>
    %104 = tpu.matmul %102, %103, %cst_53 {dimension_numbers = #tpu.dot_dimension_numbers<[1], [0], [0], [1], [0, 0, 1, 1], [], []>} : vector<8x128xbf16>, vector<128x128xbf16>, vector<8x128xf32> -> vector<8x128xf32>
    %c0_54 = arith.constant 0 : index
    %c0_55 = arith.constant 0 : index
    %105 = vector.load %arg16[%c0_54, %c0_55] : memref<1x128xf32, #tpu.memory_space<vmem>>, vector<1x128xf32>
    %106 = vector.broadcast %105 : vector<1x128xf32> to vector<8x128xf32>
    %107 = arith.addf %104, %106 : vector<8x128xf32>
    %c0_56 = arith.constant 0 : index
    %c0_57 = arith.constant 0 : index
    %108 = vector.load %arg17[%c0_56, %c0_57] : memref<8x128xf32, #tpu.memory_space<vmem>>, vector<8x128xf32>
    tpu.vector_store %arg17[%c0_56, %c0_57], %107 {strides = array<i32>} : memref<8x128xf32, #tpu.memory_space<vmem>>, vector<8x128xf32>,
    return
  }
}

</mosaic_0001>

<llo_original>
// kernel: tpu_custom_call.1
$region0: #{tpu_custom_call.1}
  #allocation0 [shape = 'u32[]', space=smem, size = 0x4, offset = 0x4, fixed_abs, tag = 'smem constant byte address 0x4 - core index']
  #allocation1 [shape = 'u32[72,128]{1,0:T(1,128)}', space=vmem, size = 0x9000, scoped, tag = 'internal scratch']
  %s0 = inlined_call_operand.hbm [shape: f32[8,32], index: 0, kind: input, shape index: {}]
  %s1 = inlined_call_operand.hbm [shape: bf16[32,256], index: 1, kind: input, shape index: {}]
  %s2 = inlined_call_operand.hbm [shape: f32[1,256], index: 2, kind: input, shape index: {}]
  %s3 = inlined_call_operand.vmem [shape: f32[1,256], index: 3, kind: input, shape index: {}]
  %s4 = inlined_call_operand.hbm [shape: f32[1,256], index: 4, kind: input, shape index: {}]
  %s5 = inlined_call_operand.hbm [shape: bf16[256,256], index: 5, kind: input, shape index: {}]
  %s6 = inlined_call_operand.vmem [shape: f32[1,256], index: 6, kind: input, shape index: {}]
  %s7 = inlined_call_operand.vmem [shape: f32[1,256], index: 7, kind: input, shape index: {}]
  %s8 = inlined_call_operand.hbm [shape: f32[1,256], index: 8, kind: input, shape index: {}]
  %s9 = inlined_call_operand.hbm [shape: bf16[256,256], index: 9, kind: input, shape index: {}]
  %s10 = inlined_call_operand.vmem [shape: f32[1,256], index: 10, kind: input, shape index: {}]
  %s11 = inlined_call_operand.vmem [shape: f32[1,256], index: 11, kind: input, shape index: {}]
  %s12 = inlined_call_operand.hbm [shape: f32[1,256], index: 12, kind: input, shape index: {}]
  %s13 = inlined_call_operand.hbm [shape: bf16[256,128], index: 13, kind: input, shape index: {}]
  %s14 = inlined_call_operand.vmem [shape: f32[1,128], index: 14, kind: input, shape index: {}]
  %s15 = inlined_call_operand.hbm [shape: bf16[128,128], index: 15, kind: input, shape index: {}]
  %s16 = inlined_call_operand.vmem [shape: f32[1,128], index: 16, kind: input, shape index: {}]
  %s17 = inlined_call_operand.hbm [shape: f32[8,128], index: 17, kind: output, shape index: {}]
  %s18 = sld [smem:[#allocation0]]
  $region118: #{tpu_custom_call.1} parent=0
    _
  %s20 = ssub.s32 1, %s18
  %s21 = scalar_select 0, %s20, %s18
  $region1: #{tpu_custom_call.1} parent=0
    #allocation2 [shape = 'u8[4096]{0}', space=vmem, size = 0x1000, scoped, tag = 'input window, operand 0, single buffered']
    #allocation3 [shape = 's32[1]{0}', space=sflag, size = 0x4, scoped, tag = 'scoped memory for tpu_custom_call.1']
    #allocation4 [shape = 's32[1]{0}', space=sflag, size = 0x4, scoped, tag = 'scoped memory for tpu_custom_call.1']
    #allocation5 [shape = 'u8[16384]{0}', space=vmem, size = 0x4000, scoped, tag = 'input window, operand 1, single buffered']
    #allocation6 [shape = 's32[1]{0}', space=sflag, size = 0x4, scoped, tag = 'scoped memory for tpu_custom_call.1']
    #allocation7 [shape = 'u8[1024]{0}', space=vmem, size = 0x400, scoped, tag = 'input window, operand 2, single buffered']
    #allocation8 [shape = 'u8[1024]{0}', space=vmem, size = 0x400, scoped, tag = 'input window, operand 4, single buffered']
    #allocation9 [shape = 's32[1]{0}', space=sflag, size = 0x4, scoped, tag = 'scoped memory for tpu_custom_call.1']
    #allocation10 [shape = 'u8[131072]{0}', space=vmem, size = 0x20000, scoped, tag = 'input window, operand 5, single buffered']
    #allocation11 [shape = 'u8[1024]{0}', space=vmem, size = 0x400, scoped, tag = 'input window, operand 8, single buffered']
    #allocation12 [shape = 's32[1]{0}', space=sflag, size = 0x4, scoped, tag = 'scoped memory for tpu_custom_call.1']
    #allocation13 [shape = 'u8[131072]{0}', space=vmem, size = 0x20000, scoped, tag = 'input window, operand 9, single buffered']
    #allocation14 [shape = 'u8[1024]{0}', space=vmem, size = 0x400, scoped, tag = 'input window, operand 12, single buffered']
    #allocation15 [shape = 's32[1]{0}', space=sflag, size = 0x4, scoped, tag = 'scoped memory for tpu_custom_call.1']
    #allocation16 [shape = 'u8[65536]{0}', space=vmem, size = 0x10000, scoped, tag = 'input window, operand 13, single buffered']
    #allocation17 [shape = 'u8[32768]{0}', space=vmem, size = 0x8000, scoped, tag = 'input window, operand 15, single buffered']
    #allocation18 [shape = 's32[1]{0}', space=sflag, size = 0x4, scoped, tag = 'scoped memory for tpu_custom_call.1']
    #allocation19 [shape = 'u8[4096]{0}', space=vmem, size = 0x1000, scoped, tag = 'output window, operand 0, single buffered']
    %22 = vsyncpa [#allocation3], 0
    %23 = vsyncpa [#allocation6], 0
    %24 = vsyncpa [#allocation9], 0
    %25 = vsyncpa [#allocation12], 0
    %26 = vsyncpa [#allocation15], 0
    %27 = vsyncpa [#allocation18], 0
    %28 = vsyncpa [#allocation4], 0
    // Predicated region
    $region2: #{tpu_custom_call.1} parent=1 // pred_check
      _
    $region3: #{tpu_custom_call.1} parent=1 // pred_check_branch
      %30 = sbr.rel (0) target = $region5
    $region4: #{tpu_custom_call.1} parent=1 // pred_region
      %32 = vsyncadd [#allocation3], 0
      %s34 = sshll.u32 %s0, 4
      %s35 = int_to_ptr.hbm [resolvable:$true] %s34
      %s36 = sshll.u32 [#allocation2], 4
      %s37 = int_to_ptr.vmem [resolvable:$true] %s36
      %39 = dma.hbm_to_vmem [thread:$0]  %s35, 128, %s37, [#allocation3]
    $region5: #{tpu_custom_call.1} parent=1 // pred_fallthru
      _
    // Predicated region
    $region6: #{tpu_custom_call.1} parent=1 // pred_check
      _
    $region7: #{tpu_custom_call.1} parent=1 // pred_check_branch
      %41 = sbr.rel (0) target = $region9
    $region8: #{tpu_custom_call.1} parent=1 // pred_region
      %43 = vsyncadd [#allocation6], 0
      %s44 = sshll.u32 %s1, 4
      %s45 = int_to_ptr.hbm [resolvable:$true] %s44
      %s46 = sshll.u32 [#allocation5], 4
      %s47 = int_to_ptr.vmem [resolvable:$true] %s46
      %52 = dma.hbm_to_vmem [thread:$0]  %s45, 512, %s47, [#allocation6], 128, 128, 8
    $region9: #{tpu_custom_call.1} parent=1 // pred_fallthru
      _
    // Predicated region
    $region10: #{tpu_custom_call.1} parent=1 // pred_check
      _
    $region11: #{tpu_custom_call.1} parent=1 // pred_check_branch
      %54 = sbr.rel (0) target = $region13
    $region12: #{tpu_custom_call.1} parent=1 // pred_region
      %56 = vsyncadd [#allocation6], 0
      %s58 = sshll.u32 %s2, 4
      %s59 = int_to_ptr.hbm [resolvable:$true] %s58
      %s60 = sshll.u32 [#allocation7], 4
      %s61 = int_to_ptr.vmem [resolvable:$true] %s60
      %63 = dma.hbm_to_vmem [thread:$0]  %s59, 32, %s61, [#allocation6]
    $region13: #{tpu_custom_call.1} parent=1 // pred_fallthru
      _
    // Predicated region
    $region14: #{tpu_custom_call.1} parent=1 // pred_check
      _
    $region15: #{tpu_custom_call.1} parent=1 // pred_check_branch
      %65 = sbr.rel (0) target = $region17
    $region16: #{tpu_custom_call.1} parent=1 // pred_region
      _
    $region17: #{tpu_custom_call.1} parent=1 // pred_fallthru
      _
    // Predicated region
    $region18: #{tpu_custom_call.1} parent=1 // pred_check
      _
    $region19: #{tpu_custom_call.1} parent=1 // pred_check_branch
      %67 = sbr.rel (0) target = $region21
    $region20: #{tpu_custom_call.1} parent=1 // pred_region
      %69 = vsyncadd [#allocation9], 0
      %s71 = sshll.u32 %s4, 4
      %s72 = int_to_ptr.hbm [resolvable:$true] %s71
      %s73 = sshll.u32 [#allocation8], 4
      %s74 = int_to_ptr.vmem [resolvable:$true] %s73
      %76 = dma.hbm_to_vmem [thread:$0]  %s72, 32, %s74, [#allocation9]
    $region21: #{tpu_custom_call.1} parent=1 // pred_fallthru
      _
    // Predicated region
    $region22: #{tpu_custom_call.1} parent=1 // pred_check
      _
    $region23: #{tpu_custom_call.1} parent=1 // pred_check_branch
      %78 = sbr.rel (0) target = $region25
    $region24: #{tpu_custom_call.1} parent=1 // pred_region
      %80 = vsyncadd [#allocation9], 0
      %s81 = sshll.u32 %s5, 4
      %s82 = int_to_ptr.hbm [resolvable:$true] %s81
      %s83 = sshll.u32 [#allocation10], 4
      %s84 = int_to_ptr.vmem [resolvable:$true] %s83
      %89 = dma.hbm_to_vmem [thread:$0]  %s82, 4096, %s84, [#allocation9], 128, 128, 8
    $region25: #{tpu_custom_call.1} parent=1 // pred_fallthru
      _
    // Predicated region
    $region26: #{tpu_custom_call.1} parent=1 // pred_check
      _
    $region27: #{tpu_custom_call.1} parent=1 // pred_check_branch
      %91 = sbr.rel (0) target = $region29
    $region28: #{tpu_custom_call.1} parent=1 // pred_region
      _
    $region29: #{tpu_custom_call.1} parent=1 // pred_fallthru
      _
    // Predicated region
    $region30: #{tpu_custom_call.1} parent=1 // pred_check
      _
    $region31: #{tpu_custom_call.1} parent=1 // pred_check_branch
      %93 = sbr.rel (0) target = $region33
    $region32: #{tpu_custom_call.1} parent=1 // pred_region
      _
    $region33: #{tpu_custom_call.1} parent=1 // pred_fallthru
      _
    // Predicated region
    $region34: #{tpu_custom_call.1} parent=1 // pred_check
      _
    $region35: #{tpu_custom_call.1} parent=1 // pred_check_branch
      %95 = sbr.rel (0) target = $region37
    $region36: #{tpu_custom_call.1} parent=1 // pred_region
      %97 = vsyncadd [#allocation12], 0
      %s99 = sshll.u32 %s8, 4
      %s100 = int_to_ptr.hbm [resolvable:$true] %s99
      %s101 = sshll.u32 [#allocation11], 4
      %s102 = int_to_ptr.vmem [resolvable:$true] %s101
      %104 = dma.hbm_to_vmem [thread:$0]  %s100, 32, %s102, [#allocation12]
    $region37: #{tpu_custom_call.1} parent=1 // pred_fallthru
      _
    // Predicated region
    $region38: #{tpu_custom_call.1} parent=1 // pred_check
      _
    $region39: #{tpu_custom_call.1} parent=1 // pred_check_branch
      %106 = sbr.rel (0) target = $region41
    $region40: #{tpu_custom_call.1} parent=1 // pred_region
      %108 = vsyncadd [#allocation12], 0
      %s109 = sshll.u32 %s9, 4
      %s110 = int_to_ptr.hbm [resolvable:$true] %s109
      %s111 = sshll.u32 [#allocation13], 4
      %s112 = int_to_ptr.vmem [resolvable:$true] %s111
      %117 = dma.hbm_to_vmem [thread:$0]  %s110, 4096, %s112, [#allocation12], 128, 128, 8
    $region41: #{tpu_custom_call.1} parent=1 // pred_fallthru
      _
    // Predicated region
    $region42: #{tpu_custom_call.1} parent=1 // pred_check
      _
    $region43: #{tpu_custom_call.1} parent=1 // pred_check_branch
      %119 = sbr.rel (0) target = $region45
    $region44: #{tpu_custom_call.1} parent=1 // pred_region
      _
    $region45: #{tpu_custom_call.1} parent=1 // pred_fallthru
      _
    // Predicated region
    $region46: #{tpu_custom_call.1} parent=1 // pred_check
      _
    $region47: #{tpu_custom_call.1} parent=1 // pred_check_branch
      %121 = sbr.rel (0) target = $region49
    $region48: #{tpu_custom_call.1} parent=1 // pred_region
      _
    $region49: #{tpu_custom_call.1} parent=1 // pred_fallthru
      _
    // Predicated region
    $region50: #{tpu_custom_call.1} parent=1 // pred_check
      _
    $region51: #{tpu_custom_call.1} parent=1 // pred_check_branch
      %123 = sbr.rel (0) target = $region53
    $region52: #{tpu_custom_call.1} parent=1 // pred_region
      %125 = vsyncadd [#allocation15], 0
      %s127 = sshll.u32 %s12, 4
      %s128 = int_to_ptr.hbm [resolvable:$true] %s127
      %s129 = sshll.u32 [#allocation14], 4
      %s130 = int_to_ptr.vmem [resolvable:$true] %s129
      %132 = dma.hbm_to_vmem [thread:$0]  %s128, 32, %s130, [#allocation15]
    $region53: #{tpu_custom_call.1} parent=1 // pred_fallthru
      _
    // Predicated region
    $region54: #{tpu_custom_call.1} parent=1 // pred_check
      _
    $region55: #{tpu_custom_call.1} parent=1 // pred_check_branch
      %134 = sbr.rel (0) target = $region57
    $region56: #{tpu_custom_call.1} parent=1 // pred_region
      %136 = vsyncadd [#allocation15], 0
      %s137 = sshll.u32 %s13, 4
      %s138 = int_to_ptr.hbm [resolvable:$true] %s137
      %s139 = sshll.u32 [#allocation16], 4
      %s140 = int_to_ptr.vmem [resolvable:$true] %s139
      %145 = dma.hbm_to_vmem [thread:$0]  %s138, 2048, %s140, [#allocation15], 64, 64, 4
    $region57: #{tpu_custom_call.1} parent=1 // pred_fallthru
      _
    // Predicated region
    $region58: #{tpu_custom_call.1} parent=1 // pred_check
      _
    $region59: #{tpu_custom_call.1} parent=1 // pred_check_branch
      %147 = sbr.rel (0) target = $region61
    $region60: #{tpu_custom_call.1} parent=1 // pred_region
      _
    $region61: #{tpu_custom_call.1} parent=1 // pred_fallthru
      _
    // Predicated region
    $region62: #{tpu_custom_call.1} parent=1 // pred_check
      _
    $region63: #{tpu_custom_call.1} parent=1 // pred_check_branch
      %149 = sbr.rel (0) target = $region65
    $region64: #{tpu_custom_call.1} parent=1 // pred_region
      %151 = vsyncadd [#allocation18], 0
      %s152 = sshll.u32 %s15, 4
      %s153 = int_to_ptr.hbm [resolvable:$true] %s152
      %s154 = sshll.u32 [#allocation17], 4
      %s155 = int_to_ptr.vmem [resolvable:$true] %s154
      %160 = dma.hbm_to_vmem [thread:$0]  %s153, 1024, %s155, [#allocation18], 64, 64, 4
    $region65: #{tpu_custom_call.1} parent=1 // pred_fallthru
      _
    // Predicated region
    $region66: #{tpu_custom_call.1} parent=1 // pred_check
      _
    $region67: #{tpu_custom_call.1} parent=1 // pred_check_branch
      %162 = sbr.rel (0) target = $region69
    $region68: #{tpu_custom_call.1} parent=1 // pred_region
      _
    $region69: #{tpu_custom_call.1} parent=1 // pred_fallthru
      _
    // Predicated region
    $region70: #{tpu_custom_call.1} parent=1 // pred_check
      _
    $region71: #{tpu_custom_call.1} parent=1 // pred_check_branch
      %164 = sbr.rel (0) target = $region73
    $region72: #{tpu_custom_call.1} parent=1 // pred_region
      %166 = dma.done [#allocation3], 128
    $region73: #{tpu_custom_call.1} parent=1 // pred_fallthru
      _
    // Predicated region
    $region74: #{tpu_custom_call.1} parent=1 // pred_check
      _
    $region75: #{tpu_custom_call.1} parent=1 // pred_check_branch
      %168 = sbr.rel (0) target = $region77
    $region76: #{tpu_custom_call.1} parent=1 // pred_region
      %170 = dma.done [#allocation6], 512
    $region77: #{tpu_custom_call.1} parent=1 // pred_fallthru
      _
    // Predicated region
    $region78: #{tpu_custom_call.1} parent=1 // pred_check
      _
    $region79: #{tpu_custom_call.1} parent=1 // pred_check_branch
      %172 = sbr.rel (0) target = $region81
    $region80: #{tpu_custom_call.1} parent=1 // pred_region
      %174 = dma.done [#allocation6], 32
    $region81: #{tpu_custom_call.1} parent=1 // pred_fallthru
      _
    // Predicated region
    $region82: #{tpu_custom_call.1} parent=1 // pred_check
      _
    $region83: #{tpu_custom_call.1} parent=1 // pred_check_branch
      %176 = sbr.rel (0) target = $region85
    $region84: #{tpu_custom_call.1} parent=1 // pred_region
      %178 = dma.done [#allocation9], 32
    $region85: #{tpu_custom_call.1} parent=1 // pred_fallthru
      _
    // Predicated region
    $region86: #{tpu_custom_call.1} parent=1 // pred_check
      _
    $region87: #{tpu_custom_call.1} parent=1 // pred_check_branch
      %180 = sbr.rel (0) target = $region89
    $region88: #{tpu_custom_call.1} parent=1 // pred_region
      %182 = dma.done [#allocation9], 4096
    $region89: #{tpu_custom_call.1} parent=1 // pred_fallthru
      _
    // Predicated region
    $region90: #{tpu_custom_call.1} parent=1 // pred_check
      _
    $region91: #{tpu_custom_call.1} parent=1 // pred_check_branch
      %184 = sbr.rel (0) target = $region93
    $region92: #{tpu_custom_call.1} parent=1 // pred_region
      %186 = dma.done [#allocation12], 32
    $region93: #{tpu_custom_call.1} parent=1 // pred_fallthru
      _
    // Predicated region
    $region94: #{tpu_custom_call.1} parent=1 // pred_check
      _
    $region95: #{tpu_custom_call.1} parent=1 // pred_check_branch
      %188 = sbr.rel (0) target = $region97
    $region96: #{tpu_custom_call.1} parent=1 // pred_region
      %190 = dma.done [#allocation12], 4096
    $region97: #{tpu_custom_call.1} parent=1 // pred_fallthru
      _
    // Predicated region
    $region98: #{tpu_custom_call.1} parent=1 // pred_check
      _
    $region99: #{tpu_custom_call.1} parent=1 // pred_check_branch
      %192 = sbr.rel (0) target = $region101
    $region100: #{tpu_custom_call.1} parent=1 // pred_region
      %194 = dma.done [#allocation15], 32
    $region101: #{tpu_custom_call.1} parent=1 // pred_fallthru
      _
    // Predicated region
    $region102: #{tpu_custom_call.1} parent=1 // pred_check
      _
    $region103: #{tpu_custom_call.1} parent=1 // pred_check_branch
      %196 = sbr.rel (0) target = $region105
    $region104: #{tpu_custom_call.1} parent=1 // pred_region
      %198 = dma.done [#allocation15], 2048
    $region105: #{tpu_custom_call.1} parent=1 // pred_fallthru
      _
    // Predicated region
    $region106: #{tpu_custom_call.1} parent=1 // pred_check
      _
    $region107: #{tpu_custom_call.1} parent=1 // pred_check_branch
      %200 = sbr.rel (0) target = $region109
    $region108: #{tpu_custom_call.1} parent=1 // pred_region
      %202 = dma.done [#allocation18], 1024
    $region109: #{tpu_custom_call.1} parent=1 // pred_fallthru
      _
    %v204 = vld [vmem:[#allocation2] sm:$0xff]
    %v205 = vpack.c.bf16 %v204, %v204
    %v206 = vld [vmem:[#allocation5] sm:$0xff]
    %v207 = vld [vmem:[#allocation5 + $0x8] sm:$0xff]
    %v208 = vld [vmem:[#allocation5 + $0x10] sm:$0xff]
    %v209 = vld [vmem:[#allocation5 + $0x18] sm:$0xff]
    %v210 = vld [vmem:[#allocation7] sm:$0x3]
    %v212 = vperm.slane %v210, 0
    %v213 = vperm.slane %v210, 1
    %v220 = vunpack.c.l.b16 %v206
    %v221 = vunpack.c.h.b16 %v206
    %v222 = vunpack.c.l.b16 %v207
    %v223 = vunpack.c.h.b16 %v207
    %v224 = vunpack.c.l.b16 %v208
    %v225 = vunpack.c.h.b16 %v208
    %v226 = vunpack.c.l.b16 %v209
    %v227 = vunpack.c.h.b16 %v209
    %v228 = vpack.c.b16 %v222, %v220
    %v229 = vpack.c.b16 %v223, %v221
    %v230 = vpack.c.b16 %v226, %v224
    %v231 = vpack.c.b16 %v227, %v225
    %vm236 = vcmask 261120
    %v238 = vsel %vm236, %v205, 0
    %240 = vmatpush.bf16.msra.mxu0 0
    %241 = vmatpush.bf16.msra.mxu0 0
    %242 = vmatpush.bf16.msra.mxu0 0
    %243 = vmatpush.bf16.msra.mxu0 0
    %244 = vmatpush.bf16.msra.mxu0 0
    %245 = vmatpush.bf16.msra.mxu0 0
    %246 = vmatpush.bf16.msra.mxu0 %v230
    %247 = vmatpush.bf16.msra.mxu0 %v228
    %248 = vmatmul.bf16.gmra.mxu0 %v238
    %v249 = vpop.f32.mrf.mxu0
    %v250 = vadd.f32 %v212, %v249
    %v251 = vpop.f32.mrf.mxu0
    %252 = vdwg.mxu0
    %253 = vmatpush.bf16.msra.mxu0 0
    %254 = vmatpush.bf16.msra.mxu0 0
    %255 = vmatpush.bf16.msra.mxu0 0
    %256 = vmatpush.bf16.msra.mxu0 0
    %257 = vmatpush.bf16.msra.mxu0 0
    %258 = vmatpush.bf16.msra.mxu0 0
    %259 = vmatpush.bf16.msra.mxu0 %v231
    %260 = vmatpush.bf16.msra.mxu0 %v229
    %261 = vmatmul.bf16.gmra.mxu0 %v238
    %v262 = vpop.f32.mrf.mxu0
    %v263 = vadd.f32 %v213, %v262
    %v264 = vpop.f32.mrf.mxu0
    %265 = vdwg.mxu0
    %v266 = vrot.slane %v250, 4
    %v267 = vadd.f32 %v250, %v266
    %v268 = vrot.slane %v267, 2
    %v269 = vadd.f32 %v267, %v268
    %v270 = vrot.slane %v269, 1
    %v271 = vadd.f32 %v269, %v270
    %v272 = vrot.slane %v263, 4
    %v273 = vadd.f32 %v263, %v272
    %v274 = vrot.slane %v273, 2
    %v275 = vadd.f32 %v273, %v274
    %v276 = vrot.slane %v275, 1
    %v277 = vadd.f32 %v275, %v276
    %v278 = vrcp.pop 8.0
    %v279 = vmul.f32 8.0, %v278
    %v280 = vsub.f32 1.0, %v279
    %v281 = vmul.f32 %v278, %v280
    %v282 = vadd.f32 %v278, %v281
    %vm283 = vweird.f32 %v278
    %v284 = vsel %vm283, %v278, %v282
    %v285 = vmul.f32 %v271, %v284
    %v286 = vmul.f32 %v277, %v284
    %v287 = vsub.f32 %v250, %v285
    %v288 = vsub.f32 %v263, %v286
    %v289 = vmul.f32 %v287, %v287
    %v290 = vmul.f32 %v288, %v288
    %v291 = vrot.slane %v289, 4
    %v292 = vadd.f32 %v289, %v291
    %v293 = vrot.slane %v292, 2
    %v294 = vadd.f32 %v292, %v293
    %v295 = vrot.slane %v294, 1
    %v296 = vadd.f32 %v294, %v295
    %v297 = vrot.slane %v290, 4
    %v298 = vadd.f32 %v290, %v297
    %v299 = vrot.slane %v298, 2
    %v300 = vadd.f32 %v298, %v299
    %v301 = vrot.slane %v300, 1
    %v302 = vadd.f32 %v300, %v301
    %v303 = vmul.f32 %v296, %v284
    %v304 = vmul.f32 %v302, %v284
    %v305 = vld [vmem:[%s3] sm:$0x3]
    %v306 = vadd.f32 %v303, 1e-05
    %v307 = vadd.f32 %v304, 1e-05
    %v308 = vrsqrt.pop %v306
    %v309 = vmul.f32 %v308, %v306
    %v310 = vmul.f32 %v309, %v308
    %v311 = vmul.f32 0.5, %v310
    %v312 = vsub.f32 1.5, %v311
    %v313 = vmul.f32 %v308, %v312
    %vm314 = vweird.f32 %v306
    %vm315 = vweird.f32 %v308
    %vm316 = vmor %vm314, %vm315
    %v317 = vsel %vm316, %v308, %v313
    %v318 = vrsqrt.pop %v307
    %v319 = vmul.f32 %v318, %v307
    %v320 = vmul.f32 %v319, %v318
    %v321 = vmul.f32 0.5, %v320
    %v322 = vsub.f32 1.5, %v321
    %v323 = vmul.f32 %v318, %v322
    %vm324 = vweird.f32 %v307
    %vm325 = vweird.f32 %v318
    %vm326 = vmor %vm324, %vm325
    %v327 = vsel %vm326, %v318, %v323
    %v330 = vrot.slane %v327, 7
    %vm331 = vcmask 1040384
    %v332 = vsel %vm331, %v317, %v330
    %v334 = vmul.f32 %v305, %v332
    %v335 = vld [vmem:[#allocation8] sm:$0x3]
    %v337 = vperm.slane %v334, 0
    %v338 = vperm.slane %v334, 1
    %v341 = vmul.f32 %v285, %v337
    %v342 = vmul.f32 %v286, %v338
    %v345 = vrot.slane %v342, 7
    %v346 = vsel %vm331, %v341, %v345
    %v348 = vsub.f32 %v335, %v346
    %v349 = vmul.f32 %v250, %v337
    %v350 = vmul.f32 %v263, %v338
    %v352 = vperm.slane %v348, 0
    %v353 = vperm.slane %v348, 1
    %v356 = vadd.f32 %v349, %v352
    %v357 = vadd.f32 %v350, %v353
    %v358 = vmax.f32 %v356, 0.0
    %v359 = vmax.f32 %v357, 0.0
    %v360 = vpack.c.bf16 %v358, %v358
    %v361 = vpack.c.bf16 %v359, %v359
    %v362 = vld [vmem:[#allocation10] sm:$0xff]
    %v363 = vld [vmem:[#allocation10 + $0x8] sm:$0xff]
    %v364 = vld [vmem:[#allocation10 + $0x10] sm:$0xff]
    %v365 = vld [vmem:[#allocation10 + $0x18] sm:$0xff]
    %v366 = vld [vmem:[#allocation10 + $0x20] sm:$0xff]
    %v367 = vld [vmem:[#allocation10 + $0x28] sm:$0xff]
    %v368 = vld [vmem:[#allocation10 + $0x30] sm:$0xff]
    %v369 = vld [vmem:[#allocation10 + $0x38] sm:$0xff]
    %v370 = vld [vmem:[#allocation10 + $0x40] sm:$0xff]
    %v371 = vld [vmem:[#allocation10 + $0x48] sm:$0xff]
    %v372 = vld [vmem:[#allocation10 + $0x50] sm:$0xff]
    %v373 = vld [vmem:[#allocation10 + $0x58] sm:$0xff]
    %v374 = vld [vmem:[#allocation10 + $0x60] sm:$0xff]
    %v375 = vld [vmem:[#allocation10 + $0x68] sm:$0xff]
    %v376 = vld [vmem:[#allocation10 + $0x70] sm:$0xff]
    %v377 = vld [vmem:[#allocation10 + $0x78] sm:$0xff]
    %v378 = vld [vmem:[#allocation10 + $0x80] sm:$0xff]
    %v379 = vld [vmem:[#allocation10 + $0x88] sm:$0xff]
    %v380 = vld [vmem:[#allocation10 + $0x90] sm:$0xff]
    %v381 = vld [vmem:[#allocation10 + $0x98] sm:$0xff]
    %v382 = vld [vmem:[#allocation10 + $0xa0] sm:$0xff]
    %v383 = vld [vmem:[#allocation10 + $0xa8] sm:$0xff]
    %v384 = vld [vmem:[#allocation10 + $0xb0] sm:$0xff]
    %v385 = vld [vmem:[#allocation10 + $0xb8] sm:$0xff]
    %v386 = vld [vmem:[#allocation10 + $0xc0] sm:$0xff]
    %v387 = vld [vmem:[#allocation10 + $0xc8] sm:$0xff]
    %v388 = vld [vmem:[#allocation10 + $0xd0] sm:$0xff]
    %v389 = vld [vmem:[#allocation10 + $0xd8] sm:$0xff]
    %v390 = vld [vmem:[#allocation10 + $0xe0] sm:$0xff]
    %v391 = vld [vmem:[#allocation10 + $0xe8] sm:$0xff]
    %v392 = vld [vmem:[#allocation10 + $0xf0] sm:$0xff]
    %v393 = vld [vmem:[#allocation10 + $0xf8] sm:$0xff]
    %v394 = vld [vmem:[%s6] sm:$0x3]
    %v396 = vperm.slane %v394, 0
    %v397 = vperm.slane %v394, 1
    %v432 = vunpack.c.l.b16 %v362
    %v433 = vunpack.c.h.b16 %v362
    %v434 = vunpack.c.l.b16 %v363
    %v435 = vunpack.c.h.b16 %v363
    %v436 = vunpack.c.l.b16 %v364
    %v437 = vunpack.c.h.b16 %v364
    %v438 = vunpack.c.l.b16 %v365
    %v439 = vunpack.c.h.b16 %v365
    %v440 = vunpack.c.l.b16 %v366
    %v441 = vunpack.c.h.b16 %v366
    %v442 = vunpack.c.l.b16 %v367
    %v443 = vunpack.c.h.b16 %v367
    %v444 = vunpack.c.l.b16 %v368
    %v445 = vunpack.c.h.b16 %v368
    %v446 = vunpack.c.l.b16 %v369
    %v447 = vunpack.c.h.b16 %v369
    %v448 = vunpack.c.l.b16 %v370
    %v449 = vunpack.c.h.b16 %v370
    %v450 = vunpack.c.l.b16 %v371
    %v451 = vunpack.c.h.b16 %v371
    %v452 = vunpack.c.l.b16 %v372
    %v453 = vunpack.c.h.b16 %v372
    %v454 = vunpack.c.l.b16 %v373
    %v455 = vunpack.c.h.b16 %v373
    %v456 = vunpack.c.l.b16 %v374
    %v457 = vunpack.c.h.b16 %v374
    %v458 = vunpack.c.l.b16 %v375
    %v459 = vunpack.c.h.b16 %v375
    %v460 = vunpack.c.l.b16 %v376
    %v461 = vunpack.c.h.b16 %v376
    %v462 = vunpack.c.l.b16 %v377
    %v463 = vunpack.c.h.b16 %v377
    %v464 = vunpack.c.l.b16 %v378
    %v465 = vunpack.c.h.b16 %v378
    %v466 = vunpack.c.l.b16 %v379
    %v467 = vunpack.c.h.b16 %v379
    %v468 = vunpack.c.l.b16 %v380
    %v469 = vunpack.c.h.b16 %v380
    %v470 = vunpack.c.l.b16 %v381
    %v471 = vunpack.c.h.b16 %v381
    %v472 = vunpack.c.l.b16 %v382
    %v473 = vunpack.c.h.b16 %v382
    %v474 = vunpack.c.l.b16 %v383
    %v475 = vunpack.c.h.b16 %v383
    %v476 = vunpack.c.l.b16 %v384
    %v477 = vunpack.c.h.b16 %v384
    %v478 = vunpack.c.l.b16 %v385
    %v479 = vunpack.c.h.b16 %v385
    %v480 = vunpack.c.l.b16 %v386
    %v481 = vunpack.c.h.b16 %v386
    %v482 = vunpack.c.l.b16 %v387
    %v483 = vunpack.c.h.b16 %v387
    %v484 = vunpack.c.l.b16 %v388
    %v485 = vunpack.c.h.b16 %v388
    %v486 = vunpack.c.l.b16 %v389
    %v487 = vunpack.c.h.b16 %v389
    %v488 = vunpack.c.l.b16 %v390
    %v489 = vunpack.c.h.b16 %v390
    %v490 = vunpack.c.l.b16 %v391
    %v491 = vunpack.c.h.b16 %v391
    %v492 = vunpack.c.l.b16 %v392
    %v493 = vunpack.c.h.b16 %v392
    %v494 = vunpack.c.l.b16 %v393
    %v495 = vunpack.c.h.b16 %v393
    %v496 = vpack.c.b16 %v434, %v432
    %v497 = vpack.c.b16 %v435, %v433
    %v498 = vpack.c.b16 %v438, %v436
    %v499 = vpack.c.b16 %v439, %v437
    %v500 = vpack.c.b16 %v442, %v440
    %v501 = vpack.c.b16 %v443, %v441
    %v502 = vpack.c.b16 %v446, %v444
    %v503 = vpack.c.b16 %v447, %v445
    %v504 = vpack.c.b16 %v450, %v448
    %v505 = vpack.c.b16 %v451, %v449
    %v506 = vpack.c.b16 %v454, %v452
    %v507 = vpack.c.b16 %v455, %v453
    %v508 = vpack.c.b16 %v458, %v456
    %v509 = vpack.c.b16 %v459, %v457
    %v510 = vpack.c.b16 %v462, %v460
    %v511 = vpack.c.b16 %v463, %v461
    %v512 = vpack.c.b16 %v466, %v464
    %v513 = vpack.c.b16 %v467, %v465
    %v514 = vpack.c.b16 %v470, %v468
    %v515 = vpack.c.b16 %v471, %v469
    %v516 = vpack.c.b16 %v474, %v472
    %v517 = vpack.c.b16 %v475, %v473
    %v518 = vpack.c.b16 %v478, %v476
    %v519 = vpack.c.b16 %v479, %v477
    %v520 = vpack.c.b16 %v482, %v480
    %v521 = vpack.c.b16 %v483, %v481
    %v522 = vpack.c.b16 %v486, %v484
    %v523 = vpack.c.b16 %v487, %v485
    %v524 = vpack.c.b16 %v490, %v488
    %v525 = vpack.c.b16 %v491, %v489
    %v526 = vpack.c.b16 %v494, %v492
    %v527 = vpack.c.b16 %v495, %v493
    %560 = vmatpush.bf16.msra.mxu0 %v510
    %561 = vmatpush.bf16.msra.mxu0 %v508
    %562 = vmatpush.bf16.msra.mxu0 %v506
    %563 = vmatpush.bf16.msra.mxu0 %v504
    %564 = vmatpush.bf16.msra.mxu0 %v502
    %565 = vmatpush.bf16.msra.mxu0 %v500
    %566 = vmatpush.bf16.msra.mxu0 %v498
    %567 = vmatpush.bf16.msra.mxu0 %v496
    %568 = vmatmul.bf16.gmra.mxu0 %v360
    %v569 = vpop.f32.mrf.mxu0
    %v570 = vadd.f32 %v396, %v569
    %v571 = vpop.f32.mrf.mxu0
    %572 = vdwg.mxu0
    %573 = vmatpush.bf16.msra.mxu0 %v526
    %574 = vmatpush.bf16.msra.mxu0 %v524
    %575 = vmatpush.bf16.msra.mxu0 %v522
    %576 = vmatpush.bf16.msra.mxu0 %v520
    %577 = vmatpush.bf16.msra.mxu0 %v518
    %578 = vmatpush.bf16.msra.mxu0 %v516
    %579 = vmatpush.bf16.msra.mxu0 %v514
    %580 = vmatpush.bf16.msra.mxu0 %v512
    %581 = vmatmul.bf16.gmra.mxu0 %v361
    %v582 = vpop.f32.mrf.mxu0
    %v583 = vadd.f32 %v570, %v582
    %v584 = vpop.f32.mrf.mxu0
    %585 = vdwg.mxu0
    %586 = vmatpush.bf16.msra.mxu0 %v511
    %587 = vmatpush.bf16.msra.mxu0 %v509
    %588 = vmatpush.bf16.msra.mxu0 %v507
    %589 = vmatpush.bf16.msra.mxu0 %v505
    %590 = vmatpush.bf16.msra.mxu0 %v503
    %591 = vmatpush.bf16.msra.mxu0 %v501
    %592 = vmatpush.bf16.msra.mxu0 %v499
    %593 = vmatpush.bf16.msra.mxu0 %v497
    %594 = vmatmul.bf16.gmra.mxu0 %v360
    %v595 = vpop.f32.mrf.mxu0
    %v596 = vadd.f32 %v397, %v595
    %v597 = vpop.f32.mrf.mxu0
    %598 = vdwg.mxu0
    %599 = vmatpush.bf16.msra.mxu0 %v527
    %600 = vmatpush.bf16.msra.mxu0 %v525
    %601 = vmatpush.bf16.msra.mxu0 %v523
    %602 = vmatpush.bf16.msra.mxu0 %v521
    %603 = vmatpush.bf16.msra.mxu0 %v519
    %604 = vmatpush.bf16.msra.mxu0 %v517
    %605 = vmatpush.bf16.msra.mxu0 %v515
    %606 = vmatpush.bf16.msra.mxu0 %v513
    %607 = vmatmul.bf16.gmra.mxu0 %v361
    %v608 = vpop.f32.mrf.mxu0
    %v609 = vadd.f32 %v596, %v608
    %v610 = vpop.f32.mrf.mxu0
    %611 = vdwg.mxu0
    %v612 = vrot.slane %v583, 4
    %v613 = vadd.f32 %v583, %v612
    %v614 = vrot.slane %v613, 2
    %v615 = vadd.f32 %v613, %v614
    %v616 = vrot.slane %v615, 1
    %v617 = vadd.f32 %v615, %v616
    %v618 = vrot.slane %v609, 4
    %v619 = vadd.f32 %v609, %v618
    %v620 = vrot.slane %v619, 2
    %v621 = vadd.f32 %v619, %v620
    %v622 = vrot.slane %v621, 1
    %v623 = vadd.f32 %v621, %v622
    %v624 = vmul.f32 %v617, %v284
    %v625 = vmul.f32 %v623, %v284
    %v626 = vsub.f32 %v583, %v624
    %v627 = vsub.f32 %v609, %v625
    %v628 = vmul.f32 %v626, %v626
    %v629 = vmul.f32 %v627, %v627
    %v630 = vrot.slane %v628, 4
    %v631 = vadd.f32 %v628, %v630
    %v632 = vrot.slane %v631, 2
    %v633 = vadd.f32 %v631, %v632
    %v634 = vrot.slane %v633, 1
    %v635 = vadd.f32 %v633, %v634
    %v636 = vrot.slane %v629, 4
    %v637 = vadd.f32 %v629, %v636
    %v638 = vrot.slane %v637, 2
    %v639 = vadd.f32 %v637, %v638
    %v640 = vrot.slane %v639, 1
    %v641 = vadd.f32 %v639, %v640
    %v642 = vmul.f32 %v635, %v284
    %v643 = vmul.f32 %v641, %v284
    %v644 = vld [vmem:[%s7] sm:$0x3]
    %v645 = vadd.f32 %v642, 1e-05
    %v646 = vadd.f32 %v643, 1e-05
    %v647 = vrsqrt.pop %v645
    %v648 = vmul.f32 %v647, %v645
    %v649 = vmul.f32 %v648, %v647
    %v650 = vmul.f32 0.5, %v649
    %v651 = vsub.f32 1.5, %v650
    %v652 = vmul.f32 %v647, %v651
    %vm653 = vweird.f32 %v645
    %vm654 = vweird.f32 %v647
    %vm655 = vmor %vm653, %vm654
    %v656 = vsel %vm655, %v647, %v652
    %v657 = vrsqrt.pop %v646
    %v658 = vmul.f32 %v657, %v646
    %v659 = vmul.f32 %v658, %v657
    %v660 = vmul.f32 0.5, %v659
    %v661 = vsub.f32 1.5, %v660
    %v662 = vmul.f32 %v657, %v661
    %vm663 = vweird.f32 %v646
    %vm664 = vweird.f32 %v657
    %vm665 = vmor %vm663, %vm664
    %v666 = vsel %vm665, %v657, %v662
    %v669 = vrot.slane %v666, 7
    %v670 = vsel %vm331, %v656, %v669
    %v672 = vmul.f32 %v644, %v670
    %v673 = vld [vmem:[#allocation11] sm:$0x3]
    %v675 = vperm.slane %v672, 0
    %v676 = vperm.slane %v672, 1
    %v679 = vmul.f32 %v624, %v675
    %v680 = vmul.f32 %v625, %v676
    %v683 = vrot.slane %v680, 7
    %v684 = vsel %vm331, %v679, %v683
    %v686 = vsub.f32 %v673, %v684
    %v687 = vmul.f32 %v583, %v675
    %v688 = vmul.f32 %v609, %v676
    %v690 = vperm.slane %v686, 0
    %v691 = vperm.slane %v686, 1
    %v694 = vadd.f32 %v687, %v690
    %v695 = vadd.f32 %v688, %v691
    %v696 = vmax.f32 %v694, 0.0
    %v697 = vmax.f32 %v695, 0.0
    %v698 = vpack.c.bf16 %v696, %v696
    %v699 = vpack.c.bf16 %v697, %v697
    %v700 = vld [vmem:[#allocation13] sm:$0xff]
    %v701 = vld [vmem:[#allocation13 + $0x8] sm:$0xff]
    %v702 = vld [vmem:[#allocation13 + $0x10] sm:$0xff]
    %v703 = vld [vmem:[#allocation13 + $0x18] sm:$0xff]
    %v704 = vld [vmem:[#allocation13 + $0x20] sm:$0xff]
    %v705 = vld [vmem:[#allocation13 + $0x28] sm:$0xff]
    %v706 = vld [vmem:[#allocation13 + $0x30] sm:$0xff]
    %v707 = vld [vmem:[#allocation13 + $0x38] sm:$0xff]
    %v708 = vld [vmem:[#allocation13 + $0x40] sm:$0xff]
    %v709 = vld [vmem:[#allocation13 + $0x48] sm:$0xff]
    %v710 = vld [vmem:[#allocation13 + $0x50] sm:$0xff]
    %v711 = vld [vmem:[#allocation13 + $0x58] sm:$0xff]
    %v712 = vld [vmem:[#allocation13 + $0x60] sm:$0xff]
    %v713 = vld [vmem:[#allocation13 + $0x68] sm:$0xff]
    %v714 = vld [vmem:[#allocation13 + $0x70] sm:$0xff]
    %v715 = vld [vmem:[#allocation13 + $0x78] sm:$0xff]
    %v716 = vld [vmem:[#allocation13 + $0x80] sm:$0xff]
    %v717 = vld [vmem:[#allocation13 + $0x88] sm:$0xff]
    %v718 = vld [vmem:[#allocation13 + $0x90] sm:$0xff]
    %v719 = vld [vmem:[#allocation13 + $0x98] sm:$0xff]
    %v720 = vld [vmem:[#allocation13 + $0xa0] sm:$0xff]
    %v721 = vld [vmem:[#allocation13 + $0xa8] sm:$0xff]
    %v722 = vld [vmem:[#allocation13 + $0xb0] sm:$0xff]
    %v723 = vld [vmem:[#allocation13 + $0xb8] sm:$0xff]
    %v724 = vld [vmem:[#allocation13 + $0xc0] sm:$0xff]
    %v725 = vld [vmem:[#allocation13 + $0xc8] sm:$0xff]
    %v726 = vld [vmem:[#allocation13 + $0xd0] sm:$0xff]
    %v727 = vld [vmem:[#allocation13 + $0xd8] sm:$0xff]
    %v728 = vld [vmem:[#allocation13 + $0xe0] sm:$0xff]
    %v729 = vld [vmem:[#allocation13 + $0xe8] sm:$0xff]
    %v730 = vld [vmem:[#allocation13 + $0xf0] sm:$0xff]
    %v731 = vld [vmem:[#allocation13 + $0xf8] sm:$0xff]
    %v732 = vld [vmem:[%s10] sm:$0x3]
    %v734 = vperm.slane %v732, 0
    %v735 = vperm.slane %v732, 1
    %v770 = vunpack.c.l.b16 %v700
    %v771 = vunpack.c.h.b16 %v700
    %v772 = vunpack.c.l.b16 %v701
    %v773 = vunpack.c.h.b16 %v701
    %v774 = vunpack.c.l.b16 %v702
    %v775 = vunpack.c.h.b16 %v702
    %v776 = vunpack.c.l.b16 %v703
    %v777 = vunpack.c.h.b16 %v703
    %v778 = vunpack.c.l.b16 %v704
    %v779 = vunpack.c.h.b16 %v704
    %v780 = vunpack.c.l.b16 %v705
    %v781 = vunpack.c.h.b16 %v705
    %v782 = vunpack.c.l.b16 %v706
    %v783 = vunpack.c.h.b16 %v706
    %v784 = vunpack.c.l.b16 %v707
    %v785 = vunpack.c.h.b16 %v707
    %v786 = vunpack.c.l.b16 %v708
    %v787 = vunpack.c.h.b16 %v708
    %v788 = vunpack.c.l.b16 %v709
    %v789 = vunpack.c.h.b16 %v709
    %v790 = vunpack.c.l.b16 %v710
    %v791 = vunpack.c.h.b16 %v710
    %v792 = vunpack.c.l.b16 %v711
    %v793 = vunpack.c.h.b16 %v711
    %v794 = vunpack.c.l.b16 %v712
    %v795 = vunpack.c.h.b16 %v712
    %v796 = vunpack.c.l.b16 %v713
    %v797 = vunpack.c.h.b16 %v713
    %v798 = vunpack.c.l.b16 %v714
    %v799 = vunpack.c.h.b16 %v714
    %v800 = vunpack.c.l.b16 %v715
    %v801 = vunpack.c.h.b16 %v715
    %v802 = vunpack.c.l.b16 %v716
    %v803 = vunpack.c.h.b16 %v716
    %v804 = vunpack.c.l.b16 %v717
    %v805 = vunpack.c.h.b16 %v717
    %v806 = vunpack.c.l.b16 %v718
    %v807 = vunpack.c.h.b16 %v718
    %v808 = vunpack.c.l.b16 %v719
    %v809 = vunpack.c.h.b16 %v719
    %v810 = vunpack.c.l.b16 %v720
    %v811 = vunpack.c.h.b16 %v720
    %v812 = vunpack.c.l.b16 %v721
    %v813 = vunpack.c.h.b16 %v721
    %v814 = vunpack.c.l.b16 %v722
    %v815 = vunpack.c.h.b16 %v722
    %v816 = vunpack.c.l.b16 %v723
    %v817 = vunpack.c.h.b16 %v723
    %v818 = vunpack.c.l.b16 %v724
    %v819 = vunpack.c.h.b16 %v724
    %v820 = vunpack.c.l.b16 %v725
    %v821 = vunpack.c.h.b16 %v725
    %v822 = vunpack.c.l.b16 %v726
    %v823 = vunpack.c.h.b16 %v726
    %v824 = vunpack.c.l.b16 %v727
    %v825 = vunpack.c.h.b16 %v727
    %v826 = vunpack.c.l.b16 %v728
    %v827 = vunpack.c.h.b16 %v728
    %v828 = vunpack.c.l.b16 %v729
    %v829 = vunpack.c.h.b16 %v729
    %v830 = vunpack.c.l.b16 %v730
    %v831 = vunpack.c.h.b16 %v730
    %v832 = vunpack.c.l.b16 %v731
    %v833 = vunpack.c.h.b16 %v731
    %v834 = vpack.c.b16 %v772, %v770
    %v835 = vpack.c.b16 %v773, %v771
    %v836 = vpack.c.b16 %v776, %v774
    %v837 = vpack.c.b16 %v777, %v775
    %v838 = vpack.c.b16 %v780, %v778
    %v839 = vpack.c.b16 %v781, %v779
    %v840 = vpack.c.b16 %v784, %v782
    %v841 = vpack.c.b16 %v785, %v783
    %v842 = vpack.c.b16 %v788, %v786
    %v843 = vpack.c.b16 %v789, %v787
    %v844 = vpack.c.b16 %v792, %v790
    %v845 = vpack.c.b16 %v793, %v791
    %v846 = vpack.c.b16 %v796, %v794
    %v847 = vpack.c.b16 %v797, %v795
    %v848 = vpack.c.b16 %v800, %v798
    %v849 = vpack.c.b16 %v801, %v799
    %v850 = vpack.c.b16 %v804, %v802
    %v851 = vpack.c.b16 %v805, %v803
    %v852 = vpack.c.b16 %v808, %v806
    %v853 = vpack.c.b16 %v809, %v807
    %v854 = vpack.c.b16 %v812, %v810
    %v855 = vpack.c.b16 %v813, %v811
    %v856 = vpack.c.b16 %v816, %v814
    %v857 = vpack.c.b16 %v817, %v815
    %v858 = vpack.c.b16 %v820, %v818
    %v859 = vpack.c.b16 %v821, %v819
    %v860 = vpack.c.b16 %v824, %v822
    %v861 = vpack.c.b16 %v825, %v823
    %v862 = vpack.c.b16 %v828, %v826
    %v863 = vpack.c.b16 %v829, %v827
    %v864 = vpack.c.b16 %v832, %v830
    %v865 = vpack.c.b16 %v833, %v831
    %898 = vmatpush.bf16.msra.mxu0 %v848
    %899 = vmatpush.bf16.msra.mxu0 %v846
    %900 = vmatpush.bf16.msra.mxu0 %v844
    %901 = vmatpush.bf16.msra.mxu0 %v842
    %902 = vmatpush.bf16.msra.mxu0 %v840
    %903 = vmatpush.bf16.msra.mxu0 %v838
    %904 = vmatpush.bf16.msra.mxu0 %v836
    %905 = vmatpush.bf16.msra.mxu0 %v834
    %906 = vmatmul.bf16.gmra.mxu0 %v698
    %v907 = vpop.f32.mrf.mxu0
    %v908 = vadd.f32 %v734, %v907
    %v909 = vpop.f32.mrf.mxu0
    %910 = vdwg.mxu0
    %911 = vmatpush.bf16.msra.mxu0 %v864
    %912 = vmatpush.bf16.msra.mxu0 %v862
    %913 = vmatpush.bf16.msra.mxu0 %v860
    %914 = vmatpush.bf16.msra.mxu0 %v858
    %915 = vmatpush.bf16.msra.mxu0 %v856
    %916 = vmatpush.bf16.msra.mxu0 %v854
    %917 = vmatpush.bf16.msra.mxu0 %v852
    %918 = vmatpush.bf16.msra.mxu0 %v850
    %919 = vmatmul.bf16.gmra.mxu0 %v699
    %v920 = vpop.f32.mrf.mxu0
    %v921 = vadd.f32 %v908, %v920
    %v922 = vpop.f32.mrf.mxu0
    %923 = vdwg.mxu0
    %924 = vmatpush.bf16.msra.mxu0 %v849
    %925 = vmatpush.bf16.msra.mxu0 %v847
    %926 = vmatpush.bf16.msra.mxu0 %v845
    %927 = vmatpush.bf16.msra.mxu0 %v843
    %928 = vmatpush.bf16.msra.mxu0 %v841
    %929 = vmatpush.bf16.msra.mxu0 %v839
    %930 = vmatpush.bf16.msra.mxu0 %v837
    %931 = vmatpush.bf16.msra.mxu0 %v835
    %932 = vmatmul.bf16.gmra.mxu0 %v698
    %v933 = vpop.f32.mrf.mxu0
    %v934 = vadd.f32 %v735, %v933
    %v935 = vpop.f32.mrf.mxu0
    %936 = vdwg.mxu0
    %937 = vmatpush.bf16.msra.mxu0 %v865
    %938 = vmatpush.bf16.msra.mxu0 %v863
    %939 = vmatpush.bf16.msra.mxu0 %v861
    %940 = vmatpush.bf16.msra.mxu0 %v859
    %941 = vmatpush.bf16.msra.mxu0 %v857
    %942 = vmatpush.bf16.msra.mxu0 %v855
    %943 = vmatpush.bf16.msra.mxu0 %v853
    %944 = vmatpush.bf16.msra.mxu0 %v851
    %945 = vmatmul.bf16.gmra.mxu0 %v699
    %v946 = vpop.f32.mrf.mxu0
    %v947 = vadd.f32 %v934, %v946
    %v948 = vpop.f32.mrf.mxu0
    %949 = vdwg.mxu0
    %v950 = vrot.slane %v921, 4
    %v951 = vadd.f32 %v921, %v950
    %v952 = vrot.slane %v951, 2
    %v953 = vadd.f32 %v951, %v952
    %v954 = vrot.slane %v953, 1
    %v955 = vadd.f32 %v953, %v954
    %v956 = vrot.slane %v947, 4
    %v957 = vadd.f32 %v947, %v956
    %v958 = vrot.slane %v957, 2
    %v959 = vadd.f32 %v957, %v958
    %v960 = vrot.slane %v959, 1
    %v961 = vadd.f32 %v959, %v960
    %v962 = vmul.f32 %v955, %v284
    %v963 = vmul.f32 %v961, %v284
    %v964 = vsub.f32 %v921, %v962
    %v965 = vsub.f32 %v947, %v963
    %v966 = vmul.f32 %v964, %v964
    %v967 = vmul.f32 %v965, %v965
    %v968 = vrot.slane %v966, 4
    %v969 = vadd.f32 %v966, %v968
    %v970 = vrot.slane %v969, 2
    %v971 = vadd.f32 %v969, %v970
    %v972 = vrot.slane %v971, 1
    %v973 = vadd.f32 %v971, %v972
    %v974 = vrot.slane %v967, 4
    %v975 = vadd.f32 %v967, %v974
    %v976 = vrot.slane %v975, 2
    %v977 = vadd.f32 %v975, %v976
    %v978 = vrot.slane %v977, 1
    %v979 = vadd.f32 %v977, %v978
    %v980 = vmul.f32 %v973, %v284
    %v981 = vmul.f32 %v979, %v284
    %v982 = vld [vmem:[%s11] sm:$0x3]
    %v983 = vadd.f32 %v980, 1e-05
    %v984 = vadd.f32 %v981, 1e-05
    %v985 = vrsqrt.pop %v983
    %v986 = vmul.f32 %v985, %v983
    %v987 = vmul.f32 %v986, %v985
    %v988 = vmul.f32 0.5, %v987
    %v989 = vsub.f32 1.5, %v988
    %v990 = vmul.f32 %v985, %v989
    %vm991 = vweird.f32 %v983
    %vm992 = vweird.f32 %v985
    %vm993 = vmor %vm991, %vm992
    %v994 = vsel %vm993, %v985, %v990
    %v995 = vrsqrt.pop %v984
    %v996 = vmul.f32 %v995, %v984
    %v997 = vmul.f32 %v996, %v995
    %v998 = vmul.f32 0.5, %v997
    %v999 = vsub.f32 1.5, %v998
    %v1000 = vmul.f32 %v995, %v999
    %vm1001 = vweird.f32 %v984
    %vm1002 = vweird.f32 %v995
    %vm1003 = vmor %vm1001, %vm1002
    %v1004 = vsel %vm1003, %v995, %v1000
    %v1007 = vrot.slane %v1004, 7
    %v1008 = vsel %vm331, %v994, %v1007
    %v1010 = vmul.f32 %v982, %v1008
    %v1011 = vld [vmem:[#allocation14] sm:$0x3]
    %v1013 = vperm.slane %v1010, 0
    %v1014 = vperm.slane %v1010, 1
    %v1017 = vmul.f32 %v962, %v1013
    %v1018 = vmul.f32 %v963, %v1014
    %v1021 = vrot.slane %v1018, 7
    %v1022 = vsel %vm331, %v1017, %v1021
    %v1024 = vsub.f32 %v1011, %v1022
    %v1025 = vmul.f32 %v921, %v1013
    %v1026 = vmul.f32 %v947, %v1014
    %v1028 = vperm.slane %v1024, 0
    %v1029 = vperm.slane %v1024, 1
    %v1032 = vadd.f32 %v1025, %v1028
    %v1033 = vadd.f32 %v1026, %v1029
    %v1034 = vmax.f32 %v1032, 0.0
    %v1035 = vmax.f32 %v1033, 0.0
    %v1036 = vpack.c.bf16 %v1034, %v1034
    %v1037 = vpack.c.bf16 %v1035, %v1035
    %v1038 = vld [vmem:[#allocation16] sm:$0xf]
    %v1039 = vld [vmem:[#allocation16 + $0x4] sm:$0xf]
    %v1040 = vld [vmem:[#allocation16 + $0x8] sm:$0xf]
    %v1041 = vld [vmem:[#allocation16 + $0xc] sm:$0xf]
    %v1042 = vld [vmem:[#allocation16 + $0x10] sm:$0xf]
    %v1043 = vld [vmem:[#allocation16 + $0x14] sm:$0xf]
    %v1044 = vld [vmem:[#allocation16 + $0x18] sm:$0xf]
    %v1045 = vld [vmem:[#allocation16 + $0x1c] sm:$0xf]
    %v1046 = vld [vmem:[#allocation16 + $0x20] sm:$0xf]
    %v1047 = vld [vmem:[#allocation16 + $0x24] sm:$0xf]
    %v1048 = vld [vmem:[#allocation16 + $0x28] sm:$0xf]
    %v1049 = vld [vmem:[#allocation16 + $0x2c] sm:$0xf]
    %v1050 = vld [vmem:[#allocation16 + $0x30] sm:$0xf]
    %v1051 = vld [vmem:[#allocation16 + $0x34] sm:$0xf]
    %v1052 = vld [vmem:[#allocation16 + $0x38] sm:$0xf]
    %v1053 = vld [vmem:[#allocation16 + $0x3c] sm:$0xf]
    %v1054 = vld [vmem:[#allocation16 + $0x40] sm:$0xf]
    %v1055 = vld [vmem:[#allocation16 + $0x44] sm:$0xf]
    %v1056 = vld [vmem:[#allocation16 + $0x48] sm:$0xf]
    %v1057 = vld [vmem:[#allocation16 + $0x4c] sm:$0xf]
    %v1058 = vld [vmem:[#allocation16 + $0x50] sm:$0xf]
    %v1059 = vld [vmem:[#allocation16 + $0x54] sm:$0xf]
    %v1060 = vld [vmem:[#allocation16 + $0x58] sm:$0xf]
    %v1061 = vld [vmem:[#allocation16 + $0x5c] sm:$0xf]
    %v1062 = vld [vmem:[#allocation16 + $0x60] sm:$0xf]
    %v1063 = vld [vmem:[#allocation16 + $0x64] sm:$0xf]
    %v1064 = vld [vmem:[#allocation16 + $0x68] sm:$0xf]
    %v1065 = vld [vmem:[#allocation16 + $0x6c] sm:$0xf]
    %v1066 = vld [vmem:[#allocation16 + $0x70] sm:$0xf]
    %v1067 = vld [vmem:[#allocation16 + $0x74] sm:$0xf]
    %v1068 = vld [vmem:[#allocation16 + $0x78] sm:$0xf]
    %v1069 = vld [vmem:[#allocation16 + $0x7c] sm:$0xf]
    %v1070 = vld [vmem:[%s14] sm:$0x1]
    %v1072 = vperm.slane %v1070, 0
    %v1106 = vunpack.c.l.b16 %v1038
    %v1107 = vunpack.c.l.b16 %v1039
    %v1108 = vunpack.c.l.b16 %v1040
    %v1109 = vunpack.c.l.b16 %v1041
    %v1110 = vunpack.c.l.b16 %v1042
    %v1111 = vunpack.c.l.b16 %v1043
    %v1112 = vunpack.c.l.b16 %v1044
    %v1113 = vunpack.c.l.b16 %v1045
    %v1114 = vunpack.c.l.b16 %v1046
    %v1115 = vunpack.c.l.b16 %v1047
    %v1116 = vunpack.c.l.b16 %v1048
    %v1117 = vunpack.c.l.b16 %v1049
    %v1118 = vunpack.c.l.b16 %v1050
    %v1119 = vunpack.c.l.b16 %v1051
    %v1120 = vunpack.c.l.b16 %v1052
    %v1121 = vunpack.c.l.b16 %v1053
    %v1122 = vunpack.c.l.b16 %v1054
    %v1123 = vunpack.c.l.b16 %v1055
    %v1124 = vunpack.c.l.b16 %v1056
    %v1125 = vunpack.c.l.b16 %v1057
    %v1126 = vunpack.c.l.b16 %v1058
    %v1127 = vunpack.c.l.b16 %v1059
    %v1128 = vunpack.c.l.b16 %v1060
    %v1129 = vunpack.c.l.b16 %v1061
    %v1130 = vunpack.c.l.b16 %v1062
    %v1131 = vunpack.c.l.b16 %v1063
    %v1132 = vunpack.c.l.b16 %v1064
    %v1133 = vunpack.c.l.b16 %v1065
    %v1134 = vunpack.c.l.b16 %v1066
    %v1135 = vunpack.c.l.b16 %v1067
    %v1136 = vunpack.c.l.b16 %v1068
    %v1137 = vunpack.c.l.b16 %v1069
    %v1138 = vpack.c.b16 %v1107, %v1106
    %v1139 = vpack.c.b16 %v1109, %v1108
    %v1140 = vpack.c.b16 %v1111, %v1110
    %v1141 = vpack.c.b16 %v1113, %v1112
    %v1142 = vpack.c.b16 %v1115, %v1114
    %v1143 = vpack.c.b16 %v1117, %v1116
    %v1144 = vpack.c.b16 %v1119, %v1118
    %v1145 = vpack.c.b16 %v1121, %v1120
    %v1146 = vpack.c.b16 %v1123, %v1122
    %v1147 = vpack.c.b16 %v1125, %v1124
    %v1148 = vpack.c.b16 %v1127, %v1126
    %v1149 = vpack.c.b16 %v1129, %v1128
    %v1150 = vpack.c.b16 %v1131, %v1130
    %v1151 = vpack.c.b16 %v1133, %v1132
    %v1152 = vpack.c.b16 %v1135, %v1134
    %v1153 = vpack.c.b16 %v1137, %v1136
    %1170 = vmatpush.bf16.msra.mxu0 %v1145
    %1171 = vmatpush.bf16.msra.mxu0 %v1144
    %1172 = vmatpush.bf16.msra.mxu0 %v1143
    %1173 = vmatpush.bf16.msra.mxu0 %v1142
    %1174 = vmatpush.bf16.msra.mxu0 %v1141
    %1175 = vmatpush.bf16.msra.mxu0 %v1140
    %1176 = vmatpush.bf16.msra.mxu0 %v1139
    %1177 = vmatpush.bf16.msra.mxu0 %v1138
    %1178 = vmatmul.bf16.gmra.mxu0 %v1036
    %v1179 = vpop.f32.mrf.mxu0
    %v1180 = vadd.f32 %v1072, %v1179
    %v1181 = vpop.f32.mrf.mxu0
    %1182 = vdwg.mxu0
    %1183 = vmatpush.bf16.msra.mxu0 %v1153
    %1184 = vmatpush.bf16.msra.mxu0 %v1152
    %1185 = vmatpush.bf16.msra.mxu0 %v1151
    %1186 = vmatpush.bf16.msra.mxu0 %v1150
    %1187 = vmatpush.bf16.msra.mxu0 %v1149
    %1188 = vmatpush.bf16.msra.mxu0 %v1148
    %1189 = vmatpush.bf16.msra.mxu0 %v1147
    %1190 = vmatpush.bf16.msra.mxu0 %v1146
    %1191 = vmatmul.bf16.gmra.mxu0 %v1037
    %v1192 = vpop.f32.mrf.mxu0
    %v1193 = vadd.f32 %v1180, %v1192
    %v1194 = vpop.f32.mrf.mxu0
    %1195 = vdwg.mxu0
    %v1196 = vmax.f32 %v1193, 0.0
    %v1197 = vpack.c.bf16 %v1196, %v1196
    %v1198 = vld [vmem:[#allocation17] sm:$0xf]
    %v1199 = vld [vmem:[#allocation17 + $0x4] sm:$0xf]
    %v1200 = vld [vmem:[#allocation17 + $0x8] sm:$0xf]
    %v1201 = vld [vmem:[#allocation17 + $0xc] sm:$0xf]
    %v1202 = vld [vmem:[#allocation17 + $0x10] sm:$0xf]
    %v1203 = vld [vmem:[#allocation17 + $0x14] sm:$0xf]
    %v1204 = vld [vmem:[#allocation17 + $0x18] sm:$0xf]
    %v1205 = vld [vmem:[#allocation17 + $0x1c] sm:$0xf]
    %v1206 = vld [vmem:[#allocation17 + $0x20] sm:$0xf]
    %v1207 = vld [vmem:[#allocation17 + $0x24] sm:$0xf]
    %v1208 = vld [vmem:[#allocation17 + $0x28] sm:$0xf]
    %v1209 = vld [vmem:[#allocation17 + $0x2c] sm:$0xf]
    %v1210 = vld [vmem:[#allocation17 + $0x30] sm:$0xf]
    %v1211 = vld [vmem:[#allocation17 + $0x34] sm:$0xf]
    %v1212 = vld [vmem:[#allocation17 + $0x38] sm:$0xf]
    %v1213 = vld [vmem:[#allocation17 + $0x3c] sm:$0xf]
    %v1214 = vld [vmem:[%s16] sm:$0x1]
    %v1216 = vperm.slane %v1214, 0
    %v1234 = vunpack.c.l.b16 %v1198
    %v1235 = vunpack.c.l.b16 %v1199
    %v1236 = vunpack.c.l.b16 %v1200
    %v1237 = vunpack.c.l.b16 %v1201
    %v1238 = vunpack.c.l.b16 %v1202
    %v1239 = vunpack.c.l.b16 %v1203
    %v1240 = vunpack.c.l.b16 %v1204
    %v1241 = vunpack.c.l.b16 %v1205
    %v1242 = vunpack.c.l.b16 %v1206
    %v1243 = vunpack.c.l.b16 %v1207
    %v1244 = vunpack.c.l.b16 %v1208
    %v1245 = vunpack.c.l.b16 %v1209
    %v1246 = vunpack.c.l.b16 %v1210
    %v1247 = vunpack.c.l.b16 %v1211
    %v1248 = vunpack.c.l.b16 %v1212
    %v1249 = vunpack.c.l.b16 %v1213
    %v1250 = vpack.c.b16 %v1235, %v1234
    %v1251 = vpack.c.b16 %v1237, %v1236
    %v1252 = vpack.c.b16 %v1239, %v1238
    %v1253 = vpack.c.b16 %v1241, %v1240
    %v1254 = vpack.c.b16 %v1243, %v1242
    %v1255 = vpack.c.b16 %v1245, %v1244
    %v1256 = vpack.c.b16 %v1247, %v1246
    %v1257 = vpack.c.b16 %v1249, %v1248
    %1266 = vmatpush.bf16.msra.mxu0 %v1257
    %1267 = vmatpush.bf16.msra.mxu0 %v1256
    %1268 = vmatpush.bf16.msra.mxu0 %v1255
    %1269 = vmatpush.bf16.msra.mxu0 %v1254
    %1270 = vmatpush.bf16.msra.mxu0 %v1253
    %1271 = vmatpush.bf16.msra.mxu0 %v1252
    %1272 = vmatpush.bf16.msra.mxu0 %v1251
    %1273 = vmatpush.bf16.msra.mxu0 %v1250
    %1274 = vmatmul.bf16.gmra.mxu0 %v1197
    %v1275 = vpop.f32.mrf.mxu0
    %v1276 = vadd.f32 %v1216, %v1275
    %v1277 = vpop.f32.mrf.mxu0
    %1278 = vdwg.mxu0
    %1279 = vst [vmem:[#allocation19] sm:$0xff] %v1276
    // Predicated region
    $region110: #{tpu_custom_call.1} parent=1 // pred_check
      _
    $region111: #{tpu_custom_call.1} parent=1 // pred_check_branch
      %1281 = sbr.rel (0) target = $region113
    $region112: #{tpu_custom_call.1} parent=1 // pred_region
      %1283 = vsyncadd [#allocation4], 0
      %s1285 = sshll.u32 [#allocation19], 4
      %s1286 = int_to_ptr.vmem [resolvable:$true] %s1285
      %s1287 = sshll.u32 %s17, 4
      %s1288 = int_to_ptr.hbm [resolvable:$true] %s1287
      %1290 = dma.vmem_to_hbm [thread:$0]  %s1286, 128, %s1288, [#allocation4]
    $region113: #{tpu_custom_call.1} parent=1 // pred_fallthru
      _
    // Predicated region
    $region114: #{tpu_custom_call.1} parent=1 // pred_check
      _
    $region115: #{tpu_custom_call.1} parent=1 // pred_check_branch
      %1292 = sbr.rel (0) target = $region117
    $region116: #{tpu_custom_call.1} parent=1 // pred_region
      %1294 = dma.done [#allocation4], 128
    $region117: #{tpu_custom_call.1} parent=1 // pred_fallthru
      _
    %1295 = vsyncpa [#allocation3], 1
    %1296 = vsyncpa [#allocation6], 1
    %1297 = vsyncpa [#allocation9], 1
    %1298 = vsyncpa [#allocation12], 1
    %1299 = vsyncpa [#allocation15], 1
    %1300 = vsyncpa [#allocation18], 1
    %1301 = vsyncpa [#allocation4], 1

</llo_original>
